<compile_context>
chip_gen: v6e
topology: v6e:2x2x1
jax: 0.10.0
libtpu: 0.0.40
codegen_flags: <defaults>
</compile_context>

<pallas_src>
import functools

import jax
import jax.numpy as jnp
from jax.experimental import pallas as pl
from jax.experimental.pallas import tpu as pltpu


# --------------------------------------------------------------------------------------
# Kernels
# --------------------------------------------------------------------------------------
def _fused_kernel(x_ref, wt_ref, b_ref, o_ref):
    # x_ref: (TR, D), wt_ref: (D, V) resident, b_ref: (1, V), o_ref: (TR, V)
    logits = jnp.dot(x_ref[...], wt_ref[...], preferred_element_type=jnp.float32)
    logits = logits + b_ref[...].astype(jnp.float32)
    m = jnp.max(logits, axis=-1, keepdims=True)
    s = logits - m
    lse = jnp.log(jnp.sum(jnp.exp(s), axis=-1, keepdims=True))   # exp/log -> EUP slot
    o_ref[...] = (s - lse).astype(o_ref.dtype)


def _tiled_kernel(x_ref, wt_ref, b_ref, o_ref, m_ref, l_ref, *, vocab, tv):
    # Grid: (row_tiles, 2, vocab_tiles).  p==0: online logsumexp pass, p==1: emit pass.
    p = pl.program_id(1)
    j = pl.program_id(2)

    @pl.when((p == 0) & (j == 0))
    def _init():
        m_ref[...] = jnp.full(m_ref.shape, -jnp.inf, dtype=jnp.float32)
        l_ref[...] = jnp.zeros(l_ref.shape, dtype=jnp.float32)

    # Native-dtype MXU matmul with f32 accumulation (recomputed in the emit pass).
    logits = jnp.dot(x_ref[...], wt_ref[...], preferred_element_type=jnp.float32)
    logits = logits + b_ref[...].astype(jnp.float32)

    if vocab % tv != 0:
        # Mask lanes past the true vocab in the ragged last tile so they cannot pollute
        # the row-wise max/sum; masked lanes are dropped by Pallas on writeback anyway.
        col = j * tv + jax.lax.broadcasted_iota(jnp.int32, logits.shape, 1)
        logits = jnp.where(col < vocab, logits, -jnp.inf)

    @pl.when(p == 0)
    def _accumulate():
        m_prev = m_ref[...]
        m_new = jnp.maximum(m_prev, jnp.max(logits, axis=-1, keepdims=True))
        l_ref[...] = l_ref[...] * jnp.exp(m_prev - m_new) + jnp.sum(
            jnp.exp(logits - m_new), axis=-1, keepdims=True)
        m_ref[...] = m_new

    @pl.when(p == 1)
    def _emit():
        lse = m_ref[...] + jnp.log(l_ref[...])
        o_ref[...] = (logits - lse).astype(o_ref.dtype)


# --------------------------------------------------------------------------------------
# Plan / tile selection
# --------------------------------------------------------------------------------------
def _round_up(a, b):
    return ((a + b - 1) // b) * b


def _sublane_multiple(itemsize):
    return 8 if itemsize >= 4 else (16 if itemsize == 2 else 32)


def _vmem_capacity_bytes():
    try:
        return int(pltpu.get_tpu_info().vmem_capacity_bytes)
    except Exception:
        return 64 << 20   # assume the smallest (v7x per-core) if the query is unavailable


def _choose_plan(rows, d_model, vocab, x_isz, w_isz, o_isz, budget):
    """Returns (row_tile, vocab_tile, fused)."""
    sub = _sublane_multiple(x_isz)
    rows_up = _round_up(rows, sub)
    tr = max(sub, min(512, rows_up))           # MXU-sized M target (512 = lcm-friendly)
    tr = max(sub, (tr // sub) * sub)

    def fused_bytes(tr_):
        w = d_model * vocab * w_isz + vocab * w_isz        # resident, single-buffered
        xin = 2 * tr_ * d_model * x_isz                    # double-buffered input
        out = 2 * tr_ * vocab * o_isz                      # double-buffered output
        tmp = 3 * tr_ * vocab * 4                          # f32 logits / softmax temporaries
        return w + xin + out + tmp

    def tiled_bytes(tr_, tv_):
        w = 2 * (d_model * tv_ * w_isz + tv_ * w_isz)      # streamed, double-buffered
        xin = 2 * tr_ * d_model * x_isz
        out = 2 * tr_ * tv_ * o_isz
        tmp = 3 * tr_ * tv_ * 4
        scr = 2 * tr_ * 4
        return w + xin + out + tmp + scr

    if fused_bytes(tr) <= budget:
        return tr, vocab, True

    tv_candidates = [c for c in (8192, 4096, 2048, 1024, 512, 256) if c <= vocab]
    if not tv_candidates:
        tv_candidates = [min(vocab, 256)]
    tr_ = tr
    while True:
        for tv_ in tv_candidates:
            if tiled_bytes(tr_, tv_) <= budget:
                return tr_, tv_, False
        if tr_ <= sub:
            return sub, tv_candidates[-1], False
        tr_ = max(sub, (tr_ // 2 // sub) * sub)


# --------------------------------------------------------------------------------------
# Public API
# --------------------------------------------------------------------------------------
def prepare_generator_params(weight, bias):
    """One-time layout plumbing: nn.Linear (vocab, d_model) weight -> (d_model, vocab)."""
    vocab, d_model = weight.shape
    w_t = jnp.asarray(weight).T.reshape(d_model, vocab)
    b2 = jnp.asarray(bias).reshape(1, vocab)
    return w_t, b2


def generator_forward(x, w_t, bias, *, row_tile=None, vocab_tile=None):
    """log_softmax(x @ w_t + bias, axis=-1).

    x:    (..., d_model)
    w_t:  (d_model, vocab)  -- pre-transposed projection weight
    bias: (vocab,) or (1, vocab)
    returns (..., vocab) in x.dtype
    """
    lead = x.shape[:-1]
    d_model = x.shape[-1]
    vocab = w_t.shape[-1]

    rows = 1
    for d in lead:
        rows *= d
    x2 = x.reshape(rows, d_model)
    b2 = bias.reshape(1, vocab)

    cap = _vmem_capacity_bytes()
    budget = (cap * 13) // 20        # ~65% of VMEM for pipelined tile data
    vmem_limit = (cap * 17) // 20    # ~85% scoped limit; tiles are sized against `budget`

    tr, tv, fused = _choose_plan(rows, d_model, vocab,
                                 x.dtype.itemsize, w_t.dtype.itemsize, x.dtype.itemsize,
                                 budget)
    if row_tile is not None:
        tr = row_tile
    if vocab_tile is not None:
        tv = vocab_tile
        fused = fused and (tv >= vocab)

    nr = pl.cdiv(rows, tr)
    out_shape = jax.ShapeDtypeStruct((rows, vocab), x.dtype)
    io_bytes = (x2.size * x2.dtype.itemsize + b2.size * b2.dtype.itemsize
                + rows * vocab * x.dtype.itemsize)

    if fused:
        cost = pl.CostEstimate(
            flops=2 * rows * d_model * vocab,
            transcendentals=rows * vocab,
            bytes_accessed=io_bytes + w_t.size * w_t.dtype.itemsize)
        out = pl.pallas_call(
            _fused_kernel,
            out_shape=out_shape,
            grid_spec=pltpu.PrefetchScalarGridSpec(
                num_scalar_prefetch=0,
                grid=(nr,),
                in_specs=[
                    pl.BlockSpec((tr, d_model), lambda i: (i, 0)),
                    # Constant index map -> resident weight/bias; single buffer saves VMEM.
                    pl.BlockSpec((d_model, vocab), lambda i: (0, 0),
                                 pipeline_mode=pl.Buffered(1)),
                    pl.BlockSpec((1, vocab), lambda i: (0, 0),
                                 pipeline_mode=pl.Buffered(1)),
                ],
                out_specs=pl.BlockSpec((tr, vocab), lambda i: (i, 0)),
            ),
            compiler_params=pltpu.CompilerParams(
                dimension_semantics=("parallel",),
                vmem_limit_bytes=vmem_limit,
            ),
            cost_estimate=cost,
        )(x2, w_t, b2)
    else:
        nv = pl.cdiv(vocab, tv)
        cost = pl.CostEstimate(
            flops=4 * rows * d_model * vocab,            # logits recomputed in the emit pass
            transcendentals=2 * rows * vocab,
            bytes_accessed=io_bytes + 2 * nr * w_t.size * w_t.dtype.itemsize)
        kernel = functools.partial(_tiled_kernel, vocab=vocab, tv=tv)
        out = pl.pallas_call(
            kernel,
            out_shape=out_shape,
            grid_spec=pltpu.PrefetchScalarGridSpec(
                num_scalar_prefetch=0,
                grid=(nr, 2, nv),
                in_specs=[
                    pl.BlockSpec((tr, d_model), lambda i, p, j: (i, 0)),
                    pl.BlockSpec((d_model, tv), lambda i, p, j: (0, j)),
                    pl.BlockSpec((1, tv), lambda i, p, j: (0, j)),
                ],
                # Pass 0 pins the output window on block (i, 0) (no mid-pass writeback);
                # pass 1 walks (i, j) and writes each block exactly once before it retires.
                out_specs=pl.BlockSpec((tr, tv), lambda i, p, j: (i, p * j)),
                scratch_shapes=[
                    pltpu.VMEM((tr, 1), jnp.float32),    # running max
                    pltpu.VMEM((tr, 1), jnp.float32),    # running sum of exp
                ],
            ),
            compiler_params=pltpu.CompilerParams(
                dimension_semantics=("parallel", "arbitrary", "arbitrary"),
                vmem_limit_bytes=vmem_limit,
            ),
            cost_estimate=cost,
        )(x2, w_t, b2)

    return out.reshape(*lead, vocab)


# --------------------------------------------------------------------------------------
# Demo / self-check
# --------------------------------------------------------------------------------------
if __name__ == "__main__":
    fwd = jax.jit(generator_forward, static_argnames=("row_tile", "vocab_tile"))

    def reference(x, weight, bias):
        logits = jnp.einsum("bsd,vd->bsv", x, weight) + bias
        return jax.nn.log_softmax(logits, axis=-1)

    def run_case(key, batch, seq, d_model, vocab, row_tile=None, vocab_tile=None):
        kx, kw, kb = jax.random.split(key, 3)
        x = jax.random.normal(kx, (batch, seq, d_model), dtype=jnp.float32)
        bound = 1.0 / (d_model ** 0.5)   # deterministic nn.Linear-style init
        weight = jax.random.uniform(kw, (vocab, d_model), jnp.float32, -bound, bound)
        bias = jax.random.uniform(kb, (vocab,), jnp.float32, -bound, bound)

        w_t, b2 = prepare_generator_params(weight, bias)
        y = fwd(x, w_t, b2, row_tile=row_tile, vocab_tile=vocab_tile)
        y = jax.block_until_ready(y)

        ref = reference(x, weight, bias)
        assert y.shape == (batch, seq, vocab) and y.dtype == x.dtype
        assert jnp.allclose(y, ref, atol=1e-5, rtol=1e-5)

    key = jax.random.PRNGKey(0)
    k1, k2, k3 = jax.random.split(key, 3)

    # Fused path: whole vocab in one lane-dense tile, resident single-buffered weight.
    run_case(k1, batch=2, seq=8, d_model=32, vocab=128)
    # Vocab-tiled two-pass online-logsumexp path (forced small vocab tile).
    run_case(k2, batch=2, seq=8, d_model=32, vocab=512, vocab_tile=128)
    # Ragged last vocab tile (lane-masked reduction).
    run_case(k3, batch=2, seq=8, d_model=32, vocab=320, vocab_tile=128)

    print("KERNEL_OK")
</pallas_src>

<mosaic_0001>
module attributes {stable_mosaic.version = 11 : i64} {
  func.func @_fused_kernel(%arg0: i32, %arg1: memref<16x32xf32, #tpu.memory_space<vmem>>, %arg2: memref<32x128xf32, #tpu.memory_space<vmem>>, %arg3: memref<1x128xf32, #tpu.memory_space<vmem>>, %arg4: memref<16x128xf32, #tpu.memory_space<vmem>>) attributes {dimension_semantics = [#tpu.dimension_semantics<parallel>], iteration_bounds = array<i64: 1>, scalar_prefetch = 0 : i64, scratch_operands = 0 : i64, tpu.core_type = #tpu.core_type<tc>, window_params = [{transform_indices = @transform_0, window_bounds = array<i64: 16, 32>}, {pipeline_mode = #tpu.pipeline_mode<synchronous>, transform_indices = @transform_1, window_bounds = array<i64: 32, 128>}, {pipeline_mode = #tpu.pipeline_mode<synchronous>, transform_indices = @transform_2, window_bounds = array<i64: 1, 128>}, {transform_indices = @transform_3, window_bounds = array<i64: 16, 128>}]} {
    %c0 = arith.constant 0 : index
    %c0_0 = arith.constant 0 : index
    %0 = vector.load %arg1[%c0, %c0_0] : memref<16x32xf32, #tpu.memory_space<vmem>>, vector<16x32xf32>
    %c0_1 = arith.constant 0 : index
    %c0_2 = arith.constant 0 : index
    %1 = vector.load %arg2[%c0_1, %c0_2] : memref<32x128xf32, #tpu.memory_space<vmem>>, vector<32x128xf32>
    %cst = arith.constant dense<0.000000e+00> : vector<16x128xf32>
    %2 = tpu.matmul %0, %1, %cst {dimension_numbers = #tpu.dot_dimension_numbers<[1], [0], [0], [1], [0, 0, 1, 1], [], []>} : vector<16x32xf32>, vector<32x128xf32>, vector<16x128xf32> -> vector<16x128xf32>
    %c0_3 = arith.constant 0 : index
    %c0_4 = arith.constant 0 : index
    %3 = vector.load %arg3[%c0_3, %c0_4] : memref<1x128xf32, #tpu.memory_space<vmem>>, vector<1x128xf32>
    %4 = vector.broadcast %3 : vector<1x128xf32> to vector<16x128xf32>
    %5 = arith.addf %2, %4 : vector<16x128xf32>
    %cst_5 = arith.constant dense<0xFF800000> : vector<16xf32>
    %6 = vector.multi_reduction <maximumf>, %5, %cst_5 [1] : vector<16x128xf32> to vector<16xf32>
    %7 = vector.shape_cast %6 : vector<16xf32> to vector<16x1xf32>
    %8 = vector.broadcast %7 : vector<16x1xf32> to vector<16x128xf32>
    %9 = arith.subf %5, %8 : vector<16x128xf32>
    %10 = math.exp %9 : vector<16x128xf32>
    %cst_6 = arith.constant dense<0.000000e+00> : vector<16xf32>
    %11 = vector.multi_reduction <add>, %10, %cst_6 [1] : vector<16x128xf32> to vector<16xf32>
    %12 = vector.shape_cast %11 : vector<16xf32> to vector<16x1xf32>
    %13 = math.log %12 : vector<16x1xf32>
    %14 = vector.broadcast %13 : vector<16x1xf32> to vector<16x128xf32>
    %15 = arith.subf %9, %14 : vector<16x128xf32>
    %c0_7 = arith.constant 0 : index
    %c0_8 = arith.constant 0 : index
    %16 = vector.load %arg4[%c0_7, %c0_8] : memref<16x128xf32, #tpu.memory_space<vmem>>, vector<16x128xf32>
    tpu.vector_store %arg4[%c0_7, %c0_8], %15 {strides = array<i32>} : memref<16x128xf32, #tpu.memory_space<vmem>>, vector<16x128xf32>,
    return
  }
  func.func @transform_0(%arg0: i32) -> (i32, i32) {
    %c0_i32 = arith.constant 0 : i32
    %c0_i32_0 = arith.constant 0 : i32
    return %arg0, %c0_i32 : i32, i32
  }
  func.func @transform_1(%arg0: i32) -> (i32, i32) {
    %c0_i32 = arith.constant 0 : i32
    %c0_i32_0 = arith.constant 0 : i32
    %c0_i32_1 = arith.constant 0 : i32
    return %c0_i32, %c0_i32_0 : i32, i32
  }
  func.func @transform_2(%arg0: i32) -> (i32, i32) {
    %c0_i32 = arith.constant 0 : i32
    %c0_i32_0 = arith.constant 0 : i32
    %c0_i32_1 = arith.constant 0 : i32
    return %c0_i32, %c0_i32_0 : i32, i32
  }
  func.func @transform_3(%arg0: i32) -> (i32, i32) {
    %c0_i32 = arith.constant 0 : i32
    %c0_i32_0 = arith.constant 0 : i32
    return %arg0, %c0_i32 : i32, i32
  }
}

</mosaic_0001>

<llo_original>
// kernel: generator_forward.1
$region0: #{generator_forward.1}
  #allocation0 [shape = 'u32[]', space=smem, size = 0x4, offset = 0x4, fixed_abs, tag = 'smem constant byte address 0x4 - core index']
  #allocation1 [shape = 'u32[144,128]{1,0:T(1,128)}', space=vmem, size = 0x12000, scoped, tag = 'internal scratch']
  %s0 = inlined_call_operand.hbm [shape: f32[16,32], index: 0, kind: input, shape index: {}]
  %s1 = inlined_call_operand.hbm [shape: f32[32,128], index: 1, kind: input, shape index: {}]
  %s2 = inlined_call_operand.vmem [shape: f32[1,128], index: 2, kind: input, shape index: {}]
  %s3 = inlined_call_operand.hbm [shape: f32[16,128], index: 3, kind: output, shape index: {}]
  %s4 = sld [smem:[#allocation0]]
  $region30: #{generator_forward.1} parent=0
    _
  %s6 = ssub.s32 1, %s4
  %s7 = scalar_select 0, %s6, %s4
  $region1: #{generator_forward.1} parent=0
    #allocation2 [shape = 'u8[8192]{0}', space=vmem, size = 0x2000, scoped, tag = 'input window, operand 0, single buffered']
    #allocation3 [shape = 's32[1]{0}', space=sflag, size = 0x4, scoped, tag = 'scoped memory for generator_forward.1']
    #allocation4 [shape = 's32[1]{0}', space=sflag, size = 0x4, scoped, tag = 'scoped memory for generator_forward.1']
    #allocation5 [shape = 'u8[16384]{0}', space=vmem, size = 0x4000, scoped, tag = 'input window, operand 1, single buffered']
    #allocation6 [shape = 's32[1]{0}', space=sflag, size = 0x4, scoped, tag = 'scoped memory for generator_forward.1']
    #allocation7 [shape = 'u8[8192]{0}', space=vmem, size = 0x2000, scoped, tag = 'output window, operand 0, single buffered']
    %8 = vsyncpa [#allocation3], 0
    %9 = vsyncpa [#allocation6], 0
    %10 = vsyncpa [#allocation4], 0
    // Predicated region
    $region2: #{generator_forward.1} parent=1 // pred_check
      _
    $region3: #{generator_forward.1} parent=1 // pred_check_branch
      %12 = sbr.rel (0) target = $region5
    $region4: #{generator_forward.1} parent=1 // pred_region
      %s14 = ssub.s32 256, 256
      %15 = vsyncadd [#allocation3], %s14
      %s16 = sshll.u32 [#allocation2], 4
      %s17 = int_to_ptr.vmem [resolvable:$true] %s16
      %22 = dma.hbm_to_vmem [thread:$0]  %s0, 256, %s17, [#allocation3], 128, 128, 8
    $region5: #{generator_forward.1} parent=1 // pred_fallthru
      _
    // Predicated region
    $region6: #{generator_forward.1} parent=1 // pred_check
      _
    $region7: #{generator_forward.1} parent=1 // pred_check_branch
      %24 = sbr.rel (0) target = $region9
    $region8: #{generator_forward.1} parent=1 // pred_region
      %s26 = ssub.s32 512, 512
      %27 = vsyncadd [#allocation6], %s26
      %s28 = sshll.u32 [#allocation5], 4
      %s29 = int_to_ptr.vmem [resolvable:$true] %s28
      %34 = dma.hbm_to_vmem [thread:$0]  %s1, 512, %s29, [#allocation6], 128, 128, 8
    $region9: #{generator_forward.1} parent=1 // pred_fallthru
      _
    // Predicated region
    $region10: #{generator_forward.1} parent=1 // pred_check
      _
    $region11: #{generator_forward.1} parent=1 // pred_check_branch
      %36 = sbr.rel (0) target = $region13
    $region12: #{generator_forward.1} parent=1 // pred_region
      _
    $region13: #{generator_forward.1} parent=1 // pred_fallthru
      _
    // Predicated region
    $region14: #{generator_forward.1} parent=1 // pred_check
      _
    $region15: #{generator_forward.1} parent=1 // pred_check_branch
      %38 = sbr.rel (0) target = $region17
    $region16: #{generator_forward.1} parent=1 // pred_region
      %39 = dma.done [#allocation3], 256
    $region17: #{generator_forward.1} parent=1 // pred_fallthru
      _
    // Predicated region
    $region18: #{generator_forward.1} parent=1 // pred_check
      _
    $region19: #{generator_forward.1} parent=1 // pred_check_branch
      %41 = sbr.rel (0) target = $region21
    $region20: #{generator_forward.1} parent=1 // pred_region
      %42 = dma.done [#allocation6], 512
    $region21: #{generator_forward.1} parent=1 // pred_fallthru
      _
    %v43 = vld [vmem:[#allocation2] sm:$0xff]
    %v44 = vld [vmem:[#allocation2 + $0x8] sm:$0xff]
    %v45 = vld [vmem:[#allocation5] sm:$0xff]
    %v46 = vld [vmem:[#allocation5 + $0x8] sm:$0xff]
    %v47 = vld [vmem:[#allocation5 + $0x10] sm:$0xff]
    %v48 = vld [vmem:[#allocation5 + $0x18] sm:$0xff]
    %v49 = vld [vmem:[%s2] sm:$0x1]
    %v51 = vlaneseq
    %v52 = vshrl.u32 %v51, 7
    %v53 = vsub.s32 0, %v52
    %v54 = vrot.slane %v49, %v53
    %vm56 = vcmask 261120
    %v58 = vsel %vm56, %v43, 0
    %v61 = vsel %vm56, %v44, 0
    %63 = vmatprep.subr.mxu0 0.0
    %64 = vmatpush1.msra.mxu0 0.0
    %65 = vmatprep.subr.mxu0 0.0
    %66 = vmatpush1.msra.mxu0 0.0
    %67 = vmatprep.subr.mxu0 0.0
    %68 = vmatpush1.msra.mxu0 0.0
    %69 = vmatprep.subr.mxu0 0.0
    %70 = vmatpush1.msra.mxu0 0.0
    %71 = vmatprep.subr.mxu0 0.0
    %72 = vmatpush1.msra.mxu0 0.0
    %73 = vmatprep.subr.mxu0 0.0
    %74 = vmatpush1.msra.mxu0 0.0
    %75 = vmatprep.subr.mxu0 0.0
    %76 = vmatpush1.msra.mxu0 0.0
    %77 = vmatprep.subr.mxu0 0.0
    %78 = vmatpush1.msra.mxu0 0.0
    %79 = vmatprep.subr.mxu0 0.0
    %80 = vmatpush1.msra.mxu0 0.0
    %81 = vmatprep.subr.mxu0 0.0
    %82 = vmatpush1.msra.mxu0 0.0
    %83 = vmatprep.subr.mxu0 0.0
    %84 = vmatpush1.msra.mxu0 0.0
    %85 = vmatprep.subr.mxu0 0.0
    %86 = vmatpush1.msra.mxu0 0.0
    %87 = vmatprep.subr.mxu0 0.0
    %88 = vmatpush1.msra.mxu0 %v48
    %89 = vmatprep.subr.mxu0 0.0
    %90 = vmatpush1.msra.mxu0 %v47
    %91 = vmatprep.subr.mxu0 0.0
    %92 = vmatpush1.msra.mxu0 %v46
    %93 = vmatprep.subr.mxu0 0.0
    %94 = vmatpush1.msra.mxu0 %v45
    %95 = vmatprep.subr.mxu0 0.0
    %96 = vmatpush2.msra.mxu0 0.0
    %97 = vmatprep.subr.mxu0 0.0
    %98 = vmatpush2.msra.mxu0 0.0
    %99 = vmatprep.subr.mxu0 0.0
    %100 = vmatpush2.msra.mxu0 0.0
    %101 = vmatprep.subr.mxu0 0.0
    %102 = vmatpush2.msra.mxu0 0.0
    %103 = vmatprep.subr.mxu0 0.0
    %104 = vmatpush2.msra.mxu0 0.0
    %105 = vmatprep.subr.mxu0 0.0
    %106 = vmatpush2.msra.mxu0 0.0
    %107 = vmatprep.subr.mxu0 0.0
    %108 = vmatpush2.msra.mxu0 0.0
    %109 = vmatprep.subr.mxu0 0.0
    %110 = vmatpush2.msra.mxu0 0.0
    %111 = vmatprep.subr.mxu0 0.0
    %112 = vmatpush2.msra.mxu0 0.0
    %113 = vmatprep.subr.mxu0 0.0
    %114 = vmatpush2.msra.mxu0 0.0
    %115 = vmatprep.subr.mxu0 0.0
    %116 = vmatpush2.msra.mxu0 0.0
    %117 = vmatprep.subr.mxu0 0.0
    %118 = vmatpush2.msra.mxu0 0.0
    %119 = vmatprep.subr.mxu0 0.0
    %120 = vmatpush2.msra.mxu0 0.0
    %121 = vmatprep.subr.mxu0 0.0
    %122 = vmatpush2.msra.mxu0 0.0
    %123 = vmatprep.subr.mxu0 0.0
    %124 = vmatpush2.msra.mxu0 0.0
    %125 = vmatprep.subr.mxu0 0.0
    %126 = vmatpush2.msra.mxu0 0.0
    %127 = vmatprep.mubr.f32.mxu0 0.0
    %128 = vmatmul.mubr.f32.gmra.mxu0 %v58
    %v129 = vpop.f32.mrf.mxu0
    %v130 = vadd.f32 %v54, %v129
    %v131 = vpop.f32.mrf.mxu0
    %132 = vmatprep.mubr.f32.mxu0 0.0
    %133 = vmatmul.mubr.f32.gmra.mxu0 %v61
    %v134 = vpop.f32.mrf.mxu0
    %v135 = vadd.f32 %v54, %v134
    %v136 = vpop.f32.mrf.mxu0
    %137 = vdwg.mxu0
    %138 = vmax.xlane.f32.xlu0 %v130
    %v139 = vpop.xlane.xlu0 %138
    %140 = vmax.xlane.f32.xlu0 %v135
    %v141 = vpop.xlane.xlu0 %140
    %v142 = vsub.f32 %v130, %v139
    %v143 = vsub.f32 %v135, %v141
    %v144 = vmul.f32 %v142, 1.442695
    %v145 = vpow.pop %v144
    %v146 = vmul.f32 %v143, 1.442695
    %v147 = vpow.pop %v146
    %148 = vadd.xlane.f32.xlu0 %v145
    %v149 = vpop.xlane.xlu0 %148
    %150 = vadd.xlane.f32.xlu0 %v147
    %v151 = vpop.xlane.xlu0 %150
    %v152 = vlog2.pop %v149
    %v153 = vmul.f32 %v152, 0.6931472
    %v154 = vlog2.pop %v151
    %v155 = vmul.f32 %v154, 0.6931472
    %v156 = vsub.f32 %v142, %v153
    %v157 = vsub.f32 %v143, %v155
    %158 = vst [vmem:[#allocation7] sm:$0xff] %v156
    %159 = vst [vmem:[#allocation7 + $0x8] sm:$0xff] %v157
    // Predicated region
    $region22: #{generator_forward.1} parent=1 // pred_check
      _
    $region23: #{generator_forward.1} parent=1 // pred_check_branch
      %161 = sbr.rel (0) target = $region25
    $region24: #{generator_forward.1} parent=1 // pred_region
      %s163 = ssub.s32 256, 256
      %164 = vsyncadd [#allocation4], %s163
      %s165 = sshll.u32 [#allocation7], 4
      %s166 = int_to_ptr.vmem [resolvable:$true] %s165
      %171 = dma.vmem_to_hbm [thread:$0]  %s166, 256, %s3, [#allocation4], 128, 128, 8
    $region25: #{generator_forward.1} parent=1 // pred_fallthru
      _
    // Predicated region
    $region26: #{generator_forward.1} parent=1 // pred_check
      _
    $region27: #{generator_forward.1} parent=1 // pred_check_branch
      %173 = sbr.rel (0) target = $region29
    $region28: #{generator_forward.1} parent=1 // pred_region
      %174 = dma.done [#allocation4], 256
    $region29: #{generator_forward.1} parent=1 // pred_fallthru
      _
    %175 = vsyncpa [#allocation3], 1
    %176 = vsyncpa [#allocation6], 1
    %177 = vsyncpa [#allocation4], 1

</llo_original>
